<compile_context>
chip_gen: v7x
topology: tpu7x:2x2x1
jax: 0.10.0
libtpu: 0.0.40
codegen_flags: <defaults>
</compile_context>

<pallas_src>
import functools

import numpy as np

import jax
import jax.numpy as jnp
from jax.experimental import pallas as pl
from jax.experimental.pallas import tpu as pltpu


# ---------------------------------------------------------------------------
# Prologue: L2-normalize along the embedding dim once, emit compute_dtype (bf16)
# ---------------------------------------------------------------------------
def _l2_normalize_kernel(x_ref, o_ref, *, min_val):
    x = x_ref[...].astype(jnp.float32)                       # (1, L, D)
    ss = jnp.sum(x * x, axis=-1, keepdims=True)
    # F.normalize(x, dim=-1, eps): x / max(||x||, eps) == x * rsqrt(max(ss, eps^2))
    o_ref[...] = (x * jax.lax.rsqrt(jnp.maximum(ss, min_val * min_val))).astype(o_ref.dtype)


def _l2_normalize(x, out_dtype, min_val):
    b, l, d = x.shape
    return pl.pallas_call(
        functools.partial(_l2_normalize_kernel, min_val=float(min_val)),
        out_shape=jax.ShapeDtypeStruct((b, l, d), out_dtype),
        grid=(b,),
        in_specs=[pl.BlockSpec((1, l, d), lambda i: (i, 0, 0))],
        out_specs=pl.BlockSpec((1, l, d), lambda i: (i, 0, 0)),
        compiler_params=pltpu.CompilerParams(dimension_semantics=("parallel",)),
    )(x)


# ---------------------------------------------------------------------------
# Stage 1: one text vs TJ images per grid step
# ---------------------------------------------------------------------------
def _damsm_word_kernel(txt_len_ref, img_len_ref, ntxt_ref, nimg_ref,
                       srs_ref, attn_ref, *, gamma1, gamma2, min_val,
                       normalize_across_spans, tj, compute_dtype, precision):
    i = pl.program_id(0)                     # text index
    jt = pl.program_id(1)                    # image-tile index
    _, tl, emb = ntxt_ref.shape
    il_p = nimg_ref.shape[1]
    nj = srs_ref.shape[1] // tj              # number of image tiles (static)

    ntxt = ntxt_ref[0]                       # (tl, emb)        pre-normalized
    nimg = nimg_ref[...]                     # (tj, il_p, emb)  pre-normalized
    t_len = txt_len_ref[i]                   # SMEM scalar: #valid words of text i
    img_len = img_len_ref[...]               # (tj, 1, 1): #valid regions per image

    # ---- word-region cosine sims: batched bf16 MXU matmul, f32 accumulation ----
    ntxt_b = jnp.broadcast_to(ntxt[None], (tj, tl, emb))
    sims = jax.lax.dot_general(ntxt_b, nimg, (((2,), (2,)), ((0,), (0,))),
                               precision=precision,
                               preferred_element_type=jnp.float32)   # (tj, tl, il_p)

    # ---- padding masks (True = padded) built from lengths ----
    word_iota = jax.lax.broadcasted_iota(jnp.int32, (tj, tl, il_p), 1)
    region_iota = jax.lax.broadcasted_iota(jnp.int32, (tj, tl, il_p), 2)
    pad = (word_iota >= t_len) | (region_iota >= img_len)

    if normalize_across_spans:
        # torch: exp(masked sims) / (sum over words + eps); exp(-inf) == 0 -> exact 0.
        # Exact divide here: this scale feeds the loss logits directly.
        e = jnp.where(pad, 0.0, jnp.exp(sims))
        sims = e / (jnp.sum(e, axis=1, keepdims=True) + min_val)

    # ---- attention over image regions (masked, gamma1) ----
    alphas = jnp.where(pad, 0.0, jnp.exp(gamma1 * sims))              # (tj, tl, il_p)
    inv_den = pl.reciprocal(jnp.sum(alphas, axis=2, keepdims=True) + min_val,
                            approx=True)
    alphas = alphas * inv_den

    # ---- per-word region contexts and word/context cosine (diagonal only) ----
    ctx = jax.lax.dot_general(alphas.astype(compute_dtype), nimg,
                              (((2,), (1,)), ((0,), (0,))),
                              precision=precision,
                              preferred_element_type=jnp.float32)     # (tj, tl, emb)
    ss = jnp.sum(ctx * ctx, axis=-1, keepdims=True)
    nctx = ctx * jax.lax.rsqrt(jnp.maximum(ss, min_val * min_val))    # F.normalize

    r = jnp.sum(ntxt.astype(jnp.float32)[None] * nctx, axis=-1)       # (tj, tl)
    word_pad2 = jax.lax.broadcasted_iota(jnp.int32, (tj, tl), 1) >= t_len
    r_exp = jnp.where(word_pad2, 0.0, jnp.exp(gamma2 * r))            # exp(gamma2*-inf)=0
    sample_r = jnp.log(jnp.sum(r_exp, axis=1, keepdims=True)) * (1.0 / gamma2)  # (tj, 1)

    # Matching scores R(i, j) for this tile: the (1, bs, 1) row block is resident
    # across the jt axis and written segment-by-segment (no RMW, no init needed).
    if nj == 1:
        srs_ref[...] = sample_r[None]                                  # (1, bs, 1)
    else:
        srs_ref[:, pl.ds(jt * tj, tj), :] = sample_r[None]

    # Word-region attention map only for the matched pair j == i.  Every attention
    # row is fully overwritten exactly once (bs_text == bs_img), so no zero-init.
    @pl.when(jt == i // tj)
    def _emit_attention():
        local = i - jt * tj
        attn_ref[...] = jax.lax.dynamic_slice_in_dim(alphas, local, 1, axis=0)


# ---------------------------------------------------------------------------
# Wrapper
# ---------------------------------------------------------------------------
def damsm_word_loss(txt, img, txt_len, img_len, *, margin=0.2, gamma1=4.0, gamma2=5.0,
                    gamma3=10.0, normalize_sim_scores_across_spans=False, min_val=1e-6,
                    compute_dtype=jnp.bfloat16, images_per_step=None):
    """Forward pass of DAMSMWordLoss.

    Returns (loss of shape (bs,), word-region attention of shape (bs, il, tl)).
    `margin` is accepted for interface parity; the PyTorch forward does not use it.
    """
    del margin
    bs, tl, emb_dim = txt.shape
    bs_i, il, emb_dim_i = img.shape
    assert bs == bs_i and emb_dim == emb_dim_i

    txt_len = txt_len.astype(jnp.int32)
    img_len = img_len.astype(jnp.int32)

    # Pad the region axis to a lane-dense multiple of 128 (padded regions are always
    # masked out since region index >= img_len), so the attention store is unmasked.
    il_p = ((il + 127) // 128) * 128
    if il_p != il:
        img = jnp.pad(img, ((0, 0), (0, il_p - il), (0, 0)))

    # Normalize once, emit compute_dtype (bf16 by default) for the MXU.
    ntxt = _l2_normalize(txt, compute_dtype, min_val)                  # (bs, tl, D)
    nimg = _l2_normalize(img, compute_dtype, min_val)                  # (bs, il_p, D)

    itemsize = int(np.dtype(compute_dtype).itemsize)
    # Images per grid step: all of them if the tile stays comfortably inside VMEM
    # (budgeted for v7x's 64 MiB; v5e/v6e have 128 MiB), otherwise an even divisor.
    if images_per_step is None:
        budget = 10 << 20
        images_per_step = max(1, min(bs, budget // max(il_p * emb_dim * itemsize, 1)))
    tj = max(1, min(int(images_per_step), bs))
    while bs % tj:
        tj -= 1
    nj = bs // tj

    vmem_need = (2 * (tj * il_p * emb_dim * itemsize                  # img tile (x2 bufs)
                      + tl * emb_dim * itemsize                       # txt tile
                      + tl * il_p * 4 + bs * 4 + tj * 4)              # attn / srs / lens
                 + 3 * tj * tl * il_p * 4                             # sims/alphas temps
                 + 3 * tj * tl * emb_dim * 4)                         # ctx/nctx temps
    vmem_limit = int(min(48 << 20, max(16 << 20, 2 * vmem_need)))

    flops = int(4 * bs * bs * tl * il_p * emb_dim)
    transcendentals = int(bs * bs * tl * (2 * il_p + 3) + 4 * bs * bs)
    bytes_accessed = int(bs * tl * emb_dim * itemsize
                         + (bs if nj > 1 else 1) * bs * il_p * emb_dim * itemsize
                         + bs * tl * il_p * 4 + bs * bs * 4)

    precision = (jax.lax.Precision.HIGHEST
                 if np.dtype(compute_dtype) == np.dtype(jnp.float32) else None)

    kernel = functools.partial(
        _damsm_word_kernel,
        gamma1=float(gamma1), gamma2=float(gamma2), min_val=float(min_val),
        normalize_across_spans=bool(normalize_sim_scores_across_spans),
        tj=tj, compute_dtype=compute_dtype, precision=precision)

    sample_rs, attn = pl.pallas_call(
        kernel,
        out_shape=(jax.ShapeDtypeStruct((bs, bs, 1), jnp.float32),
                   jax.ShapeDtypeStruct((bs, tl, il_p), jnp.float32)),
        grid_spec=pltpu.PrefetchScalarGridSpec(
            num_scalar_prefetch=1,                        # txt_len -> SMEM
            grid=(bs, nj),                                # (text i, image tile jt)
            in_specs=[
                pl.BlockSpec((tj, 1, 1), lambda i, jt, *_: (jt, 0, 0)),          # img_len
                pl.BlockSpec((1, tl, emb_dim), lambda i, jt, *_: (i, 0, 0)),      # ntxt
                pl.BlockSpec((tj, il_p, emb_dim), lambda i, jt, *_: (jt, 0, 0)),  # nimg
            ],
            out_specs=[
                pl.BlockSpec((1, bs, 1), lambda i, jt, *_: (i, 0, 0)),            # R(i, :)
                pl.BlockSpec((1, tl, il_p), lambda i, jt, *_: (i, 0, 0)),         # attention
            ]),
        compiler_params=pltpu.CompilerParams(
            dimension_semantics=("parallel", "arbitrary"),
            vmem_limit_bytes=vmem_limit),
        cost_estimate=pl.CostEstimate(flops=flops, transcendentals=transcendentals,
                                      bytes_accessed=bytes_accessed),
    )(txt_len, img_len.reshape(bs, 1, 1), ntxt, nimg)

    # ---- Stage 2 (tiny (bs, bs) symmetric -log-softmax loss) in plain JAX ----
    srs = sample_rs[:, :, 0]                               # (bs, bs): R(text i, image j)
    prob = jnp.exp(gamma3 * srs)
    diag = jnp.diagonal(prob)
    loss_txt = -jnp.log(diag / (jnp.sum(prob, axis=0) + min_val))
    loss_img = -jnp.log(diag / (jnp.sum(prob, axis=1) + min_val))
    loss = loss_txt + loss_img
    # torch: return zeros(bs) if ANY element of the result is non-finite
    loss = jnp.where(jnp.all(jnp.isfinite(loss)), loss, jnp.zeros_like(loss))

    # Layout plumbing only: alphas2.diagonal(dim1=0, dim2=1).T -> (bs, il, tl)
    attn = jnp.swapaxes(attn[:, :, :il], 1, 2)
    return loss, attn


# ---------------------------------------------------------------------------
# Pure-JAX reference (mirrors the PyTorch forward).  matmul_dtype=bf16 mirrors the
# kernel's bf16 MXU-input rounding; matmul_dtype=f32 is the exact PyTorch semantics.
# ---------------------------------------------------------------------------
def _reference(txt, img, txt_len, img_len, *, gamma1, gamma2, gamma3,
               normalize_across_spans, min_val=1e-6, matmul_dtype=jnp.float32):
    hi = jax.lax.Precision.HIGHEST
    f32 = jnp.float32
    txt = txt.astype(f32)
    img = img.astype(f32)
    bs, tl, _ = txt.shape
    _, il, _ = img.shape

    def l2norm(x):
        ss = jnp.sum(x * x, axis=-1, keepdims=True)
        return x * jax.lax.rsqrt(jnp.maximum(ss, min_val * min_val))

    ntxt = l2norm(txt).astype(matmul_dtype).astype(f32)
    nimg = l2norm(img).astype(matmul_dtype).astype(f32)
    txt_mask = jnp.arange(tl)[None, :] >= txt_len[:, None]             # (bs, tl)
    img_mask = jnp.arange(il)[None, :] >= img_len[:, None]             # (bs, il)
    mask = txt_mask[:, None, :, None] | img_mask[None, :, None, :]     # (bs, bs, tl, il)

    sims = jnp.einsum('itd,jld->ijtl', ntxt, nimg, precision=hi)
    sims = jnp.where(mask, -jnp.inf, sims)
    if normalize_across_spans:
        sims = jnp.exp(sims)
        sims = sims / (jnp.sum(sims, axis=-2, keepdims=True) + min_val)
    sims = jnp.where(mask, -jnp.inf, sims)
    alphas = jnp.exp(gamma1 * sims)
    alphas = alphas / (jnp.sum(alphas, axis=-1, keepdims=True) + min_val)
    alphas_m = alphas.astype(matmul_dtype).astype(f32)
    contexts = jnp.einsum('ijtl,jld->ijtd', alphas_m, nimg, precision=hi)
    nctx = l2norm(contexts)
    single = jnp.einsum('itd,ijtd->ijt', ntxt, nctx, precision=hi)     # diag of (tl, tl)
    single = jnp.where(txt_mask[:, None, :], -jnp.inf, single)
    single = jnp.exp(gamma2 * single)
    sample = jnp.log(jnp.sum(single, axis=-1)) / gamma2                # (bs, bs)
    prob = jnp.exp(gamma3 * sample)
    diag = jnp.diagonal(prob)
    loss_txt = -jnp.log(diag / (jnp.sum(prob, axis=0) + min_val))
    loss_img = -jnp.log(diag / (jnp.sum(prob, axis=1) + min_val))
    result = loss_txt + loss_img
    result = jnp.where(jnp.sum(~jnp.isfinite(result)) < 1, result, jnp.zeros_like(result))
    attn = jnp.swapaxes(alphas[jnp.arange(bs), jnp.arange(bs)], 1, 2)  # (bs, il, tl)
    return result, attn


if __name__ == "__main__":
    bs, tl, il, emb_dim = 2, 8, 16, 32
    key = jax.random.PRNGKey(0)
    k_txt, k_img = jax.random.split(key)
    txt = jax.random.normal(k_txt, (bs, tl, emb_dim), dtype=jnp.float32)
    img = jax.random.normal(k_img, (bs, il, emb_dim), dtype=jnp.float32)
    txt_len = jnp.array([5, 8], dtype=jnp.int32)
    img_len = jnp.array([16, 11], dtype=jnp.int32)

    for norm_spans in (False, True):
        ref_loss, ref_attn = _reference(
            txt, img, txt_len, img_len, gamma1=4.0, gamma2=5.0, gamma3=10.0,
            normalize_across_spans=norm_spans, matmul_dtype=jnp.float32)
        ref_loss_bf, ref_attn_bf = _reference(
            txt, img, txt_len, img_len, gamma1=4.0, gamma2=5.0, gamma3=10.0,
            normalize_across_spans=norm_spans, matmul_dtype=jnp.bfloat16)

        # Full-precision path: validates the exact PyTorch semantics.
        loss32, attn32 = damsm_word_loss(
            txt, img, txt_len, img_len, margin=0.2, gamma1=4.0, gamma2=5.0, gamma3=10.0,
            normalize_sim_scores_across_spans=norm_spans, compute_dtype=jnp.float32)
        loss32 = jax.block_until_ready(loss32)
        attn32 = jax.block_until_ready(attn32)
        assert loss32.shape == (bs,) and attn32.shape == (bs, il, tl)
        assert jnp.allclose(loss32, ref_loss, atol=1e-2, rtol=1e-2), (norm_spans, loss32, ref_loss)
        assert jnp.allclose(attn32, ref_attn, atol=1e-2), norm_spans

        # Default bf16-MXU path: checked against a reference that mirrors the bf16
        # rounding of the matmul inputs (tolerance loosened per the perf review).
        loss16, attn16 = damsm_word_loss(
            txt, img, txt_len, img_len, margin=0.2, gamma1=4.0, gamma2=5.0, gamma3=10.0,
            normalize_sim_scores_across_spans=norm_spans)
        loss16 = jax.block_until_ready(loss16)
        attn16 = jax.block_until_ready(attn16)
        assert loss16.shape == (bs,) and attn16.shape == (bs, il, tl)
        assert jnp.allclose(loss16, ref_loss_bf, atol=3e-2, rtol=3e-2), (norm_spans, loss16, ref_loss_bf)
        assert jnp.allclose(attn16, ref_attn_bf, atol=1e-2), norm_spans

    print("KERNEL_OK")
</pallas_src>

<mosaic_0001>
module attributes {stable_mosaic.version = 11 : i64} {
  func.func @_l2_normalize_kernel(%arg0: i32, %arg1: memref<1x8x32xf32, #tpu.memory_space<vmem>>, %arg2: memref<1x8x32xf32, #tpu.memory_space<vmem>>) attributes {dimension_semantics = [#tpu.dimension_semantics<parallel>], iteration_bounds = array<i64: 2>, scalar_prefetch = 0 : i64, scratch_operands = 0 : i64, tpu.core_type = #tpu.core_type<tc>, window_params = [{transform_indices = @transform_0, window_bounds = array<i64: 1, 8, 32>}, {transform_indices = @transform_1, window_bounds = array<i64: 1, 8, 32>}]} {
    %c0 = arith.constant 0 : index
    %c0_0 = arith.constant 0 : index
    %c0_1 = arith.constant 0 : index
    %0 = vector.load %arg1[%c0, %c0_0, %c0_1] : memref<1x8x32xf32, #tpu.memory_space<vmem>>, vector<1x8x32xf32>
    %1 = arith.mulf %0, %0 : vector<1x8x32xf32>
    %cst = arith.constant dense<0.000000e+00> : vector<1x8xf32>
    %2 = vector.multi_reduction <add>, %1, %cst [2] : vector<1x8x32xf32> to vector<1x8xf32>
    %3 = vector.shape_cast %2 : vector<1x8xf32> to vector<1x8x1xf32>
    %cst_2 = arith.constant 9.99999996E-13 : f32
    %4 = vector.broadcast %cst_2 : f32 to vector<1x8x1xf32>
    %5 = arith.maximumf %3, %4 : vector<1x8x1xf32>
    %6 = math.rsqrt %5 : vector<1x8x1xf32>
    %7 = vector.broadcast %6 : vector<1x8x1xf32> to vector<1x8x32xf32>
    %8 = arith.mulf %0, %7 : vector<1x8x32xf32>
    %c0_3 = arith.constant 0 : index
    %c0_4 = arith.constant 0 : index
    %c0_5 = arith.constant 0 : index
    %9 = vector.load %arg2[%c0_3, %c0_4, %c0_5] : memref<1x8x32xf32, #tpu.memory_space<vmem>>, vector<1x8x32xf32>
    tpu.vector_store %arg2[%c0_3, %c0_4, %c0_5], %8 {strides = array<i32>} : memref<1x8x32xf32, #tpu.memory_space<vmem>>, vector<1x8x32xf32>,
    return
  }
  func.func @transform_0(%arg0: i32) -> (i32, i32, i32) {
    %c0_i32 = arith.constant 0 : i32
    %c0_i32_0 = arith.constant 0 : i32
    %c0_i32_1 = arith.constant 0 : i32
    return %arg0, %c0_i32, %c0_i32_0 : i32, i32, i32
  }
  func.func @transform_1(%arg0: i32) -> (i32, i32, i32) {
    %c0_i32 = arith.constant 0 : i32
    %c0_i32_0 = arith.constant 0 : i32
    %c0_i32_1 = arith.constant 0 : i32
    return %arg0, %c0_i32, %c0_i32_0 : i32, i32, i32
  }
}

</mosaic_0001>

<llo_original>
// kernel: tpu_custom_call.1
$region0: #{tpu_custom_call.1}
  #allocation0 [shape = 'u32[]', space=smem, size = 0x4, offset = 0x4, fixed_abs, tag = 'smem constant byte address 0x4 - core index']
  #allocation1 [shape = 'u32[144,128]{1,0:T(1,128)}', space=vmem, size = 0x12000, scoped, tag = 'internal scratch']
  %s0 = inlined_call_operand.hbm [shape: f32[2,8,32], index: 0, kind: input, shape index: {}]
  %s1 = inlined_call_operand.hbm [shape: f32[2,8,32], index: 1, kind: output, shape index: {}]
  %s2 = sld [smem:[#allocation0]]
  $region41: #{tpu_custom_call.1} parent=0
    _
  %s4 = ssub.s32 1, %s2
  %s5 = scalar_select 0, %s4, %s2
  $region1: #{tpu_custom_call.1} parent=0
    #allocation2 [shape = 'u8[8192]{0}', space=vmem, size = 0x2000, scoped, tag = 'input window, operand 0']
    #allocation3 [shape = 's32[2]{0}', space=sflag, size = 0x8, scoped, tag = 'scoped memory for tpu_custom_call.1']
    #allocation4 [shape = 's32[2]{0}', space=sflag, size = 0x8, scoped, tag = 'scoped memory for tpu_custom_call.1']
    #allocation5 [shape = 'u8[8192]{0}', space=vmem, size = 0x2000, scoped, tag = 'output window, operand 0']
    %6 = vsyncpa [#allocation3], 0
    %s7 = scalar_lea.sflag [#allocation3], 1
    %8 = vsyncpa %s7, 0
    %9 = vsyncpa [#allocation4], 0
    %s10 = scalar_lea.sflag [#allocation4], 1
    %11 = vsyncpa %s10, 0
    loop: start=0, step=1, limit=4
    $region2: #{tpu_custom_call.1} parent=1 // loop_pre_header
      _
    $region3: #{tpu_custom_call.1} parent=1 // loop_header
      %s13 = sphi 0, %s17
      %p14 = scmp.ge.s32.totalorder %s13, 4
      %s23 = sphi 0, %s25
      %s26 = sphi 0, %s23
      %s27 = sphi 0, %s26
      %s43 = sphi 0, %s27
      %s49 = sphi 0, %s51
      %s52 = sphi 0, %s49
      %s53 = sphi 0, %s52
      %s69 = sphi 0, %s53
    $region4: #{tpu_custom_call.1} parent=1 // loop_header_branch
      %16 = sbr.rel (%p14) target = $region8
    $region5: #{tpu_custom_call.1} parent=1 // loop_body
      %s18 = ssub.s32 %s13, 1
      %s19 = ssub.s32 %s13, 2
      %s20 = sadd.s32 %s13, 1
      %s21 = ssub.s32 %s13, %s20
      %p22 = scmp.eq.s32.totalorder %s21, 0
      %s24 = sadd.s32 %s23, 1
      %s25 = scalar_select %p22, %s23, %s24
      %p28 = pneg %p22
      %p29 = scmp.eq.s32.totalorder %s13, 1
      %p30 = por %p28, %p29
      %p31 = scmp.ne.s32.totalorder %s23, %s26
      %p32 = scmp.eq.s32.totalorder %s13, 0
      %p33 = por %p31, %p32
      %p34 = scmp.ne.s32.totalorder %s23, %s26
      %p35 = scmp.eq.s32.totalorder %s18, 1
      %p36 = por %p34, %p35
      %p37 = scmp.ne.s32.totalorder %s26, %s27
      %p38 = scmp.eq.s32.totalorder %s18, 0
      %p39 = por %p37, %p38
      %p40 = scmp.ne.s32.totalorder %s26, %s27
      %p41 = scmp.eq.s32.totalorder %s19, 1
      %p42 = por %p40, %p41
      %p44 = scmp.ne.s32.totalorder %s27, %s43
      %p45 = scmp.eq.s32.totalorder %s19, 0
      %p46 = por %p44, %p45
      %s47 = ssub.s32 %s13, %s20
      %p48 = scmp.eq.s32.totalorder %s47, 0
      %s50 = sadd.s32 %s49, 1
      %s51 = scalar_select %p48, %s49, %s50
      %p54 = pneg %p48
      %p55 = scmp.eq.s32.totalorder %s13, 1
      %p56 = por %p54, %p55
      %p57 = scmp.ne.s32.totalorder %s49, %s52
      %p58 = scmp.eq.s32.totalorder %s13, 0
      %p59 = por %p57, %p58
      %p60 = scmp.ne.s32.totalorder %s49, %s52
      %p61 = scmp.eq.s32.totalorder %s18, 1
      %p62 = por %p60, %p61
      %p63 = scmp.ne.s32.totalorder %s52, %s53
      %p64 = scmp.eq.s32.totalorder %s18, 0
      %p65 = por %p63, %p64
      %p66 = scmp.ne.s32.totalorder %s52, %s53
      %p67 = scmp.eq.s32.totalorder %s19, 1
      %p68 = por %p66, %p67
      %p70 = scmp.ne.s32.totalorder %s53, %s69
      %p71 = scmp.eq.s32.totalorder %s19, 0
      %p72 = por %p70, %p71
      %p73 = scmp.le.s32.totalorder 1, %s13
      %p74 = scmp.lt.s32.totalorder %s13, 3
      %p75 = pnand %p73, %p74
      %p76 = pneg %p75
      // Predicated region
      $region9: #{tpu_custom_call.1} parent=5 // pred_check
        _
      $region10: #{tpu_custom_call.1} parent=5 // pred_check_branch
        %78 = sbr.rel (%p75) target = $region12
      $region11: #{tpu_custom_call.1} parent=5 // pred_region
        %s79 = ssub.s32 %s13, 1
      $region12: #{tpu_custom_call.1} parent=5 // pred_fallthru
        _
      %p80 = scmp.lt.s32.totalorder %s13, 2
      // Predicated region
      $region13: #{tpu_custom_call.1} parent=5 // pred_check
        %p81 = pneg %p80
      $region14: #{tpu_custom_call.1} parent=5 // pred_check_branch
        %83 = sbr.rel (%p81) target = $region16
      $region15: #{tpu_custom_call.1} parent=5 // pred_region
        // Predicated region
        $region17: #{tpu_custom_call.1} parent=15 // pred_check
          %p84 = pneg %p33
        $region18: #{tpu_custom_call.1} parent=15 // pred_check_branch
          %86 = sbr.rel (%p84) target = $region20
        $region19: #{tpu_custom_call.1} parent=15 // pred_region
          %s87 = sand.u32 %s23, 1
          %s88 = scalar_lea.sflag [#allocation3], %s87
          %s89 = sand.u32 %s23, 1
          %s90 = smul.addr %s89, 8
          %s91 = scalar_lea.vmem [#allocation2], %s90
          %s93 = ssub.s32 128, 128
          %94 = vsyncadd %s88, %s93
          %s95 = smul.addr %s13, 128
          %s96 = scalar_lea.hbm %s0, %s95
          %s98 = sshll.u32 %s91, 4
          %s99 = int_to_ptr.vmem [resolvable:$true] %s98
          %101 = dma.hbm_to_vmem [thread:$0]  %s96, 128, %s99, %s88
        $region20: #{tpu_custom_call.1} parent=15 // pred_fallthru
          _
      $region16: #{tpu_custom_call.1} parent=5 // pred_fallthru
        _
      %p102 = scmp.le.s32.totalorder 1, %s13
      %p103 = scmp.lt.s32.totalorder %s13, 3
      %p104 = pnand %p102, %p103
      %p105 = pneg %p104
      // Predicated region
      $region21: #{tpu_custom_call.1} parent=5 // pred_check
        _
      $region22: #{tpu_custom_call.1} parent=5 // pred_check_branch
        %107 = sbr.rel (%p104) target = $region24
      $region23: #{tpu_custom_call.1} parent=5 // pred_region
        %s108 = ssub.s32 %s13, 1
        %s109 = sand.u32 %s26, 1
        %s110 = scalar_lea.sflag [#allocation3], %s109
        %s111 = sand.u32 %s26, 1
        %s112 = smul.addr %s111, 8
        %s113 = scalar_lea.vmem [#allocation2], %s112
        // Predicated region
        $region25: #{tpu_custom_call.1} parent=23 // pred_check
          %p114 = pneg %p39
        $region26: #{tpu_custom_call.1} parent=23 // pred_check_branch
          %116 = sbr.rel (%p114) target = $region28
        $region27: #{tpu_custom_call.1} parent=23 // pred_region
          %117 = dma.done %s110, 128
        $region28: #{tpu_custom_call.1} parent=23 // pred_fallthru
          _
        %s118 = sand.u32 %s26, 1
        %s119 = scalar_lea.sflag [#allocation3], %s118
        %s120 = sand.u32 %s26, 1
        %s121 = smul.addr %s120, 8
        %s122 = scalar_lea.vmem [#allocation2], %s121
        %p123 = pneg %p39
        %p124 = pneg %p36
        %p125 = pneg %p65
        %p126 = pneg %p62
        %s127 = sand.u32 %s52, 1
        %s128 = scalar_lea.sflag [#allocation4], %s127
        %s129 = sand.u32 %s52, 1
        %s130 = smul.addr %s129, 8
        %s131 = scalar_lea.vmem [#allocation5], %s130
        %v132 = vld [vmem:[%s113] sm:$0xff]
        %v133 = vmul.f32 %v132, %v132
        %vm134 = vcmask 261120
        %v135 = vsel %vm134, %v133, 0.0
        %136 = vadd.xlane.f32.xlu0 %v135
        %v137 = vpop.xlane.xlu0 %136
        %v138 = vmax.f32 %v137, 1e-12
        %v139 = vrsqrt.pop %v138
        %v140 = vmul.f32 %v132, %v139
        %141 = vst.msk [vmem:[%s131] sm:$0xff] %vm134, %v140
        %s142 = sand.u32 %s52, 1
        %s143 = scalar_lea.sflag [#allocation4], %s142
        %s144 = sand.u32 %s52, 1
        %s145 = smul.addr %s144, 8
        %s146 = scalar_lea.vmem [#allocation5], %s145
        // Predicated region
        $region29: #{tpu_custom_call.1} parent=23 // pred_check
          %p147 = pneg %p62
        $region30: #{tpu_custom_call.1} parent=23 // pred_check_branch
          %149 = sbr.rel (%p147) target = $region32
        $region31: #{tpu_custom_call.1} parent=23 // pred_region
          %s151 = ssub.s32 128, 128
          %152 = vsyncadd %s143, %s151
          %s153 = smul.addr %s18, 128
          %s154 = scalar_lea.hbm %s1, %s153
          %s156 = sshll.u32 %s146, 4
          %s157 = int_to_ptr.vmem [resolvable:$true] %s156
          %159 = dma.vmem_to_hbm [thread:$0]  %s157, 128, %s154, %s143
        $region32: #{tpu_custom_call.1} parent=23 // pred_fallthru
          _
      $region24: #{tpu_custom_call.1} parent=5 // pred_fallthru
        _
      %p160 = scmp.le.s32.totalorder 2, %s13
      // Predicated region
      $region33: #{tpu_custom_call.1} parent=5 // pred_check
        %p161 = pneg %p160
      $region34: #{tpu_custom_call.1} parent=5 // pred_check_branch
        %163 = sbr.rel (%p161) target = $region36
      $region35: #{tpu_custom_call.1} parent=5 // pred_region
        %s164 = ssub.s32 %s13, 2
        // Predicated region
        $region37: #{tpu_custom_call.1} parent=35 // pred_check
          %p165 = pneg %p68
        $region38: #{tpu_custom_call.1} parent=35 // pred_check_branch
          %167 = sbr.rel (%p165) target = $region40
        $region39: #{tpu_custom_call.1} parent=35 // pred_region
          %s168 = sand.u32 %s53, 1
          %s169 = scalar_lea.sflag [#allocation4], %s168
          %s170 = sand.u32 %s53, 1
          %s171 = smul.addr %s170, 8
          %s172 = scalar_lea.vmem [#allocation5], %s171
          %173 = dma.done %s169, 128
        $region40: #{tpu_custom_call.1} parent=35 // pred_fallthru
          _
      $region36: #{tpu_custom_call.1} parent=5 // pred_fallthru
        _
    $region6: #{tpu_custom_call.1} parent=1 // loop_footer
      %s17 = sadd.s32 1, %s13
    $region7: #{tpu_custom_call.1} parent=1 // loop_footer_branch
      %12 = sbr.rel target = $region3
    $region8: #{tpu_custom_call.1} parent=1 // loop_exit
      _
    %174 = vsyncpa [#allocation3], 1
    %s175 = scalar_lea.sflag [#allocation3], 1
    %176 = vsyncpa %s175, 1
    %177 = vsyncpa [#allocation4], 1
    %s178 = scalar_lea.sflag [#allocation4], 1
    %179 = vsyncpa %s178, 1

</llo_original>
